<compile_context>
chip_gen: v7x
topology: tpu7x:2x2x1
jax: 0.10.0
libtpu: 0.0.40
codegen_flags: <defaults>
</compile_context>

<pallas_src>
import jax
import jax.numpy as jnp
from jax.experimental import pallas as pl
from jax.experimental.pallas import tpu as pltpu

_MIB = 1024 * 1024


def _round_up(x, m):
    return (x + m - 1) // m * m


def _vmem_capacity_bytes():
    """Physical VMEM of the current chip; conservative (v7x) fallback."""
    try:
        return int(pltpu.get_tpu_info().vmem_capacity_bytes)
    except Exception:
        return 64 * _MIB


def _lane_pad_multiple():
    """Pad H / O to 256 on v6e/v7x (256x256 MXU); 128 on older chips."""
    try:
        kind = jax.devices()[0].device_kind.lower()
        if any(t in kind for t in ("v2", "v3", "v4", "v5")):
            return 128
    except Exception:
        pass
    return 256


def _mlp_kernel(x_ref, w1_ref, b1_ref, w2_ref, b2_ref, o_ref, h_acc):
    """Fused out = relu(x @ W1 + b1) @ W2 + b2 over grid (batch tile i, K tile k)."""
    k = pl.program_id(1)

    # First matmul: bf16 MXU inputs, f32 accumulation into VMEM scratch.
    partial = jnp.dot(x_ref[...], w1_ref[...], preferred_element_type=jnp.float32)

    @pl.when(k == 0)
    def _first():
        h_acc[...] = partial            # no zero-fill + read-add-store on step 0

    @pl.when(k > 0)
    def _accum():
        h_acc[...] += partial

    @pl.when(k == pl.num_programs(1) - 1)
    def _finalize():
        # Epilogue in f32: bias + ReLU, then second MXU matmul (bf16 in, f32 acc).
        h = jnp.maximum(h_acc[...] + b1_ref[...], 0.0)
        out = jnp.dot(h.astype(w2_ref.dtype), w2_ref[...],
                      preferred_element_type=jnp.float32)
        o_ref[...] = (out + b2_ref[...]).astype(o_ref.dtype)


def _choose_tiles(B, Fp, Hp, Op, out_bytes, vmem_budget,
                  target_b=512, target_k=1024):
    """Pick (block_b, block_k) that fit the VMEM budget; block_k divides Fp."""
    # Candidate K tiles: multiples of 128 that exactly divide Fp, largest first.
    n = Fp // 128
    k_divs = sorted((d * 128 for d in range(1, n + 1) if n % d == 0), reverse=True)
    k_divs = [k for k in k_divs if k <= target_k] or [128]

    block_b = min(target_b, _round_up(B, 16))

    def usage(bb, bk):
        return (2 * bb * bk * 2               # x tile       (bf16, double-buffered)
                + 2 * bk * Hp * 2             # W1 K-tile    (bf16, double-buffered)
                + 1 * Hp * Op * 2             # W2 resident  (bf16, single-buffered)
                + 2 * (Hp + Op) * 4           # biases (f32)
                + bb * Hp * 4                 # h_acc scratch (f32)
                + 2 * bb * Op * out_bytes     # output tile  (double-buffered)
                + bb * Hp * 2 + bb * Op * 4)  # epilogue temps (bf16 h, f32 out)

    # Shrink the reduction tile first (cheapest), then the batch tile.
    ki = 0
    block_k = k_divs[ki]
    while usage(block_b, block_k) > vmem_budget and ki + 1 < len(k_divs):
        ki += 1
        block_k = k_divs[ki]
    while usage(block_b, block_k) > vmem_budget and block_b > 16:
        block_b = max(16, _round_up(block_b // 2, 16))

    # Megacore: >=2 batch tiles whenever B allows, so the "parallel" batch axis can
    # be sharded across both TensorCores (v7x has 2 per chip).
    while pl.cdiv(B, block_b) < 2 and block_b >= 32:
        block_b = _round_up(block_b // 2, 16)

    return block_b, block_k


def prepare_params(w1, b1, w2, b2, *, lane_mult=None):
    """Pad + cast the weights ONCE (hoisted out of the per-call path)."""
    if lane_mult is None:
        lane_mult = _lane_pad_multiple()
    F, H = w1.shape
    O = w2.shape[1]
    Fp = _round_up(F, 128)
    Hp = _round_up(H, lane_mult)
    Op = _round_up(O, lane_mult)
    # Zero padding is exact: padded hidden units give relu(0+0)=0 and padded output
    # columns / batch rows are sliced off after the kernel.
    w1_p = jnp.pad(w1, ((0, Fp - F), (0, Hp - H))).astype(jnp.bfloat16)
    w2_p = jnp.pad(w2, ((0, Hp - H), (0, Op - O))).astype(jnp.bfloat16)
    b1_p = jnp.pad(b1, (0, Hp - H)).astype(jnp.float32).reshape(1, Hp)
    b2_p = jnp.pad(b2, (0, Op - O)).astype(jnp.float32).reshape(1, Op)
    return dict(w1=w1_p, b1=b1_p, w2=w2_p, b2=b2_p, F=F, H=H, O=O)


def net_forward(x, params, *, target_block_b=512, target_block_k=1024):
    """Fused MLP forward.  x: [B, F]; params from prepare_params."""
    w1_p, b1_p, w2_p, b2_p = params["w1"], params["b1"], params["w2"], params["b2"]
    B, F = x.shape
    assert F == params["F"], "x feature dim does not match prepared params"
    Fp, Hp = w1_p.shape
    Op = w2_p.shape[1]
    O = params["O"]
    out_dtype = x.dtype
    out_bytes = jnp.dtype(out_dtype).itemsize

    vmem_cap = _vmem_capacity_bytes()
    vmem_budget = int(vmem_cap * 0.70)   # tile sizing budget
    vmem_limit = int(vmem_cap * 0.85)    # compiler scoped-VMEM cap, with headroom

    block_b, block_k = _choose_tiles(B, Fp, Hp, Op, out_bytes, vmem_budget,
                                     target_b=target_block_b,
                                     target_k=target_block_k)
    Bp = _round_up(B, block_b)

    # Only x is padded per call (weights were prepared once).
    x_p = jnp.pad(x, ((0, Bp - B), (0, Fp - F))).astype(jnp.bfloat16)

    grid = (Bp // block_b, Fp // block_k)

    # W1 is streamed from HBM once per *batch tile*, not once total.
    cost = pl.CostEstimate(
        flops=2 * Bp * (Fp * Hp + Hp * Op),
        transcendentals=0,
        bytes_accessed=(Bp * Fp * 2                 # x (bf16)
                        + grid[0] * Fp * Hp * 2     # W1 re-streamed per batch tile
                        + Hp * Op * 2               # W2 (bf16)
                        + (Hp + Op) * 4             # biases (f32)
                        + Bp * Op * out_bytes),     # output
    )

    def build(single_buffer_invariants):
        inv_kw = ({"pipeline_mode": pl.Buffered(1)}
                  if single_buffer_invariants else {})
        return pl.pallas_call(
            _mlp_kernel,
            out_shape=jax.ShapeDtypeStruct((Bp, Op), out_dtype),
            grid_spec=pltpu.PrefetchScalarGridSpec(
                num_scalar_prefetch=0,
                grid=grid,
                in_specs=[
                    pl.BlockSpec((block_b, block_k), lambda i, k: (i, k)),   # x tile
                    pl.BlockSpec((block_k, Hp), lambda i, k: (k, 0)),        # W1 K-tile
                    pl.BlockSpec((1, Hp), lambda i, k: (0, 0), **inv_kw),    # b1 (invariant)
                    pl.BlockSpec((Hp, Op), lambda i, k: (0, 0), **inv_kw),   # W2 (invariant)
                    pl.BlockSpec((1, Op), lambda i, k: (0, 0), **inv_kw),    # b2 (invariant)
                ],
                out_specs=pl.BlockSpec((block_b, Op), lambda i, k: (i, 0)),
                scratch_shapes=[pltpu.VMEM((block_b, Hp), jnp.float32)],     # hidden acc
            ),
            compiler_params=pltpu.CompilerParams(
                dimension_semantics=("parallel", "arbitrary"),
                vmem_limit_bytes=vmem_limit,
            ),
            cost_estimate=cost,
        )

    try:
        out_p = build(True)(x_p, w1_p, b1_p, w2_p, b2_p)
    except Exception:
        # Some jax versions may reject Buffered(1); fall back to default buffering.
        out_p = build(False)(x_p, w1_p, b1_p, w2_p, b2_p)

    return out_p[:B, :O]


def _init_params(key, input_features, hidden_sizes, output_features, dtype=jnp.float32):
    """Deterministic PyTorch-Linear-style uniform init."""
    k1, k2, k3, k4 = jax.random.split(key, 4)
    bound1 = 1.0 / (input_features ** 0.5)
    bound2 = 1.0 / (hidden_sizes ** 0.5)
    w1 = jax.random.uniform(k1, (input_features, hidden_sizes), dtype,
                            minval=-bound1, maxval=bound1)
    b1 = jax.random.uniform(k2, (hidden_sizes,), dtype, minval=-bound1, maxval=bound1)
    w2 = jax.random.uniform(k3, (hidden_sizes, output_features), dtype,
                            minval=-bound2, maxval=bound2)
    b2 = jax.random.uniform(k4, (output_features,), dtype, minval=-bound2, maxval=bound2)
    return w1, b1, w2, b2


if __name__ == "__main__":
    # Small shapes consistent with Net(input_features, hidden_sizes, output_features).
    B, F, H, O = 16, 32, 32, 16

    key = jax.random.PRNGKey(0)
    kx, kp = jax.random.split(key)

    # SparseLinear expects a (mostly) sparse input; emulate with a sparsified dense x.
    x_dense = jax.random.normal(kx, (B, F), jnp.float32)
    mask = (jax.random.uniform(jax.random.fold_in(kx, 1), (B, F)) < 0.25).astype(jnp.float32)
    x = x_dense * mask  # dense representation of a sparse input

    w1, b1, w2, b2 = _init_params(kp, F, H, O)

    # Weight padding / bf16 cast done once, outside the per-call path.
    params = prepare_params(w1, b1, w2, b2)

    out = net_forward(x, params)
    out = jax.block_until_ready(out)

    # Reference check in plain JAX (f32 math; kernel uses bf16 MXU inputs, loose tol).
    ref = jnp.maximum(x @ w1 + b1, 0.0) @ w2 + b2
    assert out.shape == (B, O)
    assert jnp.allclose(out, ref, atol=3e-2, rtol=3e-2), \
        f"max abs err {jnp.max(jnp.abs(out - ref))}"

    print("KERNEL_OK")
</pallas_src>

<mosaic_0001>
module attributes {stable_mosaic.version = 11 : i64} {
  func.func @_mlp_kernel(%arg0: i32, %arg1: i32, %arg2: memref<16x128xbf16, #tpu.memory_space<vmem>>, %arg3: memref<128x256xbf16, #tpu.memory_space<vmem>>, %arg4: memref<1x256xf32, #tpu.memory_space<vmem>>, %arg5: memref<256x256xbf16, #tpu.memory_space<vmem>>, %arg6: memref<1x256xf32, #tpu.memory_space<vmem>>, %arg7: memref<16x256xf32, #tpu.memory_space<vmem>>, %arg8: memref<16x256xf32, #tpu.memory_space<vmem>>) attributes {dimension_semantics = [#tpu.dimension_semantics<parallel>, #tpu.dimension_semantics<arbitrary>], iteration_bounds = array<i64: 1, 1>, scalar_prefetch = 0 : i64, scratch_operands = 1 : i64, tpu.core_type = #tpu.core_type<tc>, window_params = [{transform_indices = @transform_0, window_bounds = array<i64: 16, 128>}, {transform_indices = @transform_1, window_bounds = array<i64: 128, 256>}, {pipeline_mode = #tpu.pipeline_mode<synchronous>, transform_indices = @transform_2, window_bounds = array<i64: 1, 256>}, {pipeline_mode = #tpu.pipeline_mode<synchronous>, transform_indices = @transform_3, window_bounds = array<i64: 256, 256>}, {pipeline_mode = #tpu.pipeline_mode<synchronous>, transform_indices = @transform_4, window_bounds = array<i64: 1, 256>}, {transform_indices = @transform_5, window_bounds = array<i64: 16, 256>}]} {
    %c0 = arith.constant 0 : index
    %c0_0 = arith.constant 0 : index
    %0 = vector.load %arg2[%c0, %c0_0] : memref<16x128xbf16, #tpu.memory_space<vmem>>, vector<16x128xbf16>
    %c0_1 = arith.constant 0 : index
    %c0_2 = arith.constant 0 : index
    %1 = vector.load %arg3[%c0_1, %c0_2] : memref<128x256xbf16, #tpu.memory_space<vmem>>, vector<128x256xbf16>
    %cst = arith.constant dense<0.000000e+00> : vector<16x256xf32>
    %2 = tpu.matmul %0, %1, %cst {dimension_numbers = #tpu.dot_dimension_numbers<[1], [0], [0], [1], [0, 0, 1, 1], [], []>} : vector<16x128xbf16>, vector<128x256xbf16>, vector<16x256xf32> -> vector<16x256xf32>
    %c0_i32 = arith.constant 0 : i32
    %3 = arith.cmpi eq, %arg1, %c0_i32 : i32
    %4 = arith.extui %3 : i1 to i32
    %c0_i32_3 = arith.constant 0 : i32
    %5 = arith.cmpi ne, %4, %c0_i32_3 : i32
    scf.if %5 {
      %c0_8 = arith.constant 0 : index
      %c0_9 = arith.constant 0 : index
      %12 = vector.load %arg8[%c0_8, %c0_9] : memref<16x256xf32, #tpu.memory_space<vmem>>, vector<16x256xf32>
      tpu.vector_store %arg8[%c0_8, %c0_9], %2 {strides = array<i32>} : memref<16x256xf32, #tpu.memory_space<vmem>>, vector<16x256xf32>,
    } else {
    }
    %c0_i32_4 = arith.constant 0 : i32
    %6 = arith.cmpi sgt, %arg1, %c0_i32_4 : i32
    %7 = arith.extui %6 : i1 to i32
    %c0_i32_5 = arith.constant 0 : i32
    %8 = arith.cmpi ne, %7, %c0_i32_5 : i32
    scf.if %8 {
      %c0_8 = arith.constant 0 : index
      %c0_9 = arith.constant 0 : index
      %12 = vector.load %arg8[%c0_8, %c0_9] : memref<16x256xf32, #tpu.memory_space<vmem>>, vector<16x256xf32>
      %13 = arith.addf %12, %2 : vector<16x256xf32>
      %c0_10 = arith.constant 0 : index
      %c0_11 = arith.constant 0 : index
      %14 = vector.load %arg8[%c0_10, %c0_11] : memref<16x256xf32, #tpu.memory_space<vmem>>, vector<16x256xf32>
      tpu.vector_store %arg8[%c0_10, %c0_11], %13 {strides = array<i32>} : memref<16x256xf32, #tpu.memory_space<vmem>>, vector<16x256xf32>,
    } else {
    }
    %c0_i32_6 = arith.constant 0 : i32
    %9 = arith.cmpi eq, %arg1, %c0_i32_6 : i32
    %10 = arith.extui %9 : i1 to i32
    %c0_i32_7 = arith.constant 0 : i32
    %11 = arith.cmpi ne, %10, %c0_i32_7 : i32
    scf.if %11 {
      %c0_8 = arith.constant 0 : index
      %c0_9 = arith.constant 0 : index
      %12 = vector.load %arg8[%c0_8, %c0_9] : memref<16x256xf32, #tpu.memory_space<vmem>>, vector<16x256xf32>
      %c0_10 = arith.constant 0 : index
      %c0_11 = arith.constant 0 : index
      %13 = vector.load %arg4[%c0_10, %c0_11] : memref<1x256xf32, #tpu.memory_space<vmem>>, vector<1x256xf32>
      %14 = vector.broadcast %13 : vector<1x256xf32> to vector<16x256xf32>
      %15 = arith.addf %12, %14 : vector<16x256xf32>
      %cst_12 = arith.constant 0.000000e+00 : f32
      %16 = vector.broadcast %cst_12 : f32 to vector<16x256xf32>
      %17 = arith.maximumf %15, %16 : vector<16x256xf32>
      %18 = arith.truncf %17 : vector<16x256xf32> to vector<16x256xbf16>
      %c0_13 = arith.constant 0 : index
      %c0_14 = arith.constant 0 : index
      %19 = vector.load %arg5[%c0_13, %c0_14] : memref<256x256xbf16, #tpu.memory_space<vmem>>, vector<256x256xbf16>
      %cst_15 = arith.constant dense<0.000000e+00> : vector<16x256xf32>
      %20 = tpu.matmul %18, %19, %cst_15 {dimension_numbers = #tpu.dot_dimension_numbers<[1], [0], [0], [1], [0, 0, 1, 1], [], []>} : vector<16x256xbf16>, vector<256x256xbf16>, vector<16x256xf32> -> vector<16x256xf32>
      %c0_16 = arith.constant 0 : index
      %c0_17 = arith.constant 0 : index
      %21 = vector.load %arg6[%c0_16, %c0_17] : memref<1x256xf32, #tpu.memory_space<vmem>>, vector<1x256xf32>
      %22 = vector.broadcast %21 : vector<1x256xf32> to vector<16x256xf32>
      %23 = arith.addf %20, %22 : vector<16x256xf32>
      %c0_18 = arith.constant 0 : index
      %c0_19 = arith.constant 0 : index
      %24 = vector.load %arg7[%c0_18, %c0_19] : memref<16x256xf32, #tpu.memory_space<vmem>>, vector<16x256xf32>
      tpu.vector_store %arg7[%c0_18, %c0_19], %23 {strides = array<i32>} : memref<16x256xf32, #tpu.memory_space<vmem>>, vector<16x256xf32>,
    } else {
    }
    return
  }
  func.func @transform_0(%arg0: i32, %arg1: i32) -> (i32, i32) {
    %c0_i32 = arith.constant 0 : i32
    return %arg0, %arg1 : i32, i32
  }
  func.func @transform_1(%arg0: i32, %arg1: i32) -> (i32, i32) {
    %c0_i32 = arith.constant 0 : i32
    %c0_i32_0 = arith.constant 0 : i32
    return %arg1, %c0_i32 : i32, i32
  }
  func.func @transform_2(%arg0: i32, %arg1: i32) -> (i32, i32) {
    %c0_i32 = arith.constant 0 : i32
    %c0_i32_0 = arith.constant 0 : i32
    %c0_i32_1 = arith.constant 0 : i32
    return %c0_i32, %c0_i32_0 : i32, i32
  }
  func.func @transform_3(%arg0: i32, %arg1: i32) -> (i32, i32) {
    %c0_i32 = arith.constant 0 : i32
    %c0_i32_0 = arith.constant 0 : i32
    %c0_i32_1 = arith.constant 0 : i32
    return %c0_i32, %c0_i32_0 : i32, i32
  }
  func.func @transform_4(%arg0: i32, %arg1: i32) -> (i32, i32) {
    %c0_i32 = arith.constant 0 : i32
    %c0_i32_0 = arith.constant 0 : i32
    %c0_i32_1 = arith.constant 0 : i32
    return %c0_i32, %c0_i32_0 : i32, i32
  }
  func.func @transform_5(%arg0: i32, %arg1: i32) -> (i32, i32) {
    %c0_i32 = arith.constant 0 : i32
    %c0_i32_0 = arith.constant 0 : i32
    return %arg0, %c0_i32 : i32, i32
  }
}

module attributes {stable_mosaic.version = 11 : i64} {
  func.func @_mlp_kernel(%arg0: i32, %arg1: i32, %arg2: memref<16x128xbf16, #tpu.memory_space<vmem>>, %arg3: memref<128x256xbf16, #tpu.memory_space<vmem>>, %arg4: memref<1x256xf32, #tpu.memory_space<vmem>>, %arg5: memref<256x256xbf16, #tpu.memory_space<vmem>>, %arg6: memref<1x256xf32, #tpu.memory_space<vmem>>, %arg7: memref<16x256xf32, #tpu.memory_space<vmem>>, %arg8: memref<16x256xf32, #tpu.memory_space<vmem>>) attributes {dimension_semantics = [#tpu.dimension_semantics<parallel>, #tpu.dimension_semantics<arbitrary>], iteration_bounds = array<i64: 1, 1>, scalar_prefetch = 0 : i64, scratch_operands = 1 : i64, tpu.core_type = #tpu.core_type<tc>, window_params = [{transform_indices = @transform_0, window_bounds = array<i64: 16, 128>}, {transform_indices = @transform_1, window_bounds = array<i64: 128, 256>}, {pipeline_mode = #tpu.pipeline_mode<synchronous>, transform_indices = @transform_2, window_bounds = array<i64: 1, 256>}, {pipeline_mode = #tpu.pipeline_mode<synchronous>, transform_indices = @transform_3, window_bounds = array<i64: 256, 256>}, {pipeline_mode = #tpu.pipeline_mode<synchronous>, transform_indices = @transform_4, window_bounds = array<i64: 1, 256>}, {transform_indices = @transform_5, window_bounds = array<i64: 16, 256>}]} {
    %c0 = arith.constant 0 : index
    %c0_0 = arith.constant 0 : index
    %0 = vector.load %arg2[%c0, %c0_0] : memref<16x128xbf16, #tpu.memory_space<vmem>>, vector<16x128xbf16>
    %c0_1 = arith.constant 0 : index
    %c0_2 = arith.constant 0 : index
    %1 = vector.load %arg3[%c0_1, %c0_2] : memref<128x256xbf16, #tpu.memory_space<vmem>>, vector<128x256xbf16>
    %cst = arith.constant dense<0.000000e+00> : vector<16x256xf32>
    %2 = tpu.matmul %0, %1, %cst {dimension_numbers = #tpu.dot_dimension_numbers<[1], [0], [0], [1], [0, 0, 1, 1], [], []>} : vector<16x128xbf16>, vector<128x256xbf16>, vector<16x256xf32> -> vector<16x256xf32>
    %c0_i32 = arith.constant 0 : i32
    %3 = arith.cmpi eq, %arg1, %c0_i32 : i32
    %4 = arith.extui %3 : i1 to i32
    %c0_i32_3 = arith.constant 0 : i32
    %5 = arith.cmpi ne, %4, %c0_i32_3 : i32
    scf.if %5 {
      %c0_8 = arith.constant 0 : index
      %c0_9 = arith.constant 0 : index
      %12 = vector.load %arg8[%c0_8, %c0_9] : memref<16x256xf32, #tpu.memory_space<vmem>>, vector<16x256xf32>
      tpu.vector_store %arg8[%c0_8, %c0_9], %2 {strides = array<i32>} : memref<16x256xf32, #tpu.memory_space<vmem>>, vector<16x256xf32>,
    } else {
    }
    %c0_i32_4 = arith.constant 0 : i32
    %6 = arith.cmpi sgt, %arg1, %c0_i32_4 : i32
    %7 = arith.extui %6 : i1 to i32
    %c0_i32_5 = arith.constant 0 : i32
    %8 = arith.cmpi ne, %7, %c0_i32_5 : i32
    scf.if %8 {
      %c0_8 = arith.constant 0 : index
      %c0_9 = arith.constant 0 : index
      %12 = vector.load %arg8[%c0_8, %c0_9] : memref<16x256xf32, #tpu.memory_space<vmem>>, vector<16x256xf32>
      %13 = arith.addf %12, %2 : vector<16x256xf32>
      %c0_10 = arith.constant 0 : index
      %c0_11 = arith.constant 0 : index
      %14 = vector.load %arg8[%c0_10, %c0_11] : memref<16x256xf32, #tpu.memory_space<vmem>>, vector<16x256xf32>
      tpu.vector_store %arg8[%c0_10, %c0_11], %13 {strides = array<i32>} : memref<16x256xf32, #tpu.memory_space<vmem>>, vector<16x256xf32>,
    } else {
    }
    %c0_i32_6 = arith.constant 0 : i32
    %9 = arith.cmpi eq, %arg1, %c0_i32_6 : i32
    %10 = arith.extui %9 : i1 to i32
    %c0_i32_7 = arith.constant 0 : i32
    %11 = arith.cmpi ne, %10, %c0_i32_7 : i32
    scf.if %11 {
      %c0_8 = arith.constant 0 : index
      %c0_9 = arith.constant 0 : index
      %12 = vector.load %arg8[%c0_8, %c0_9] : memref<16x256xf32, #tpu.memory_space<vmem>>, vector<16x256xf32>
      %c0_10 = arith.constant 0 : index
      %c0_11 = arith.constant 0 : index
      %13 = vector.load %arg4[%c0_10, %c0_11] : memref<1x256xf32, #tpu.memory_space<vmem>>, vector<1x256xf32>
      %14 = vector.broadcast %13 : vector<1x256xf32> to vector<16x256xf32>
      %15 = arith.addf %12, %14 : vector<16x256xf32>
      %cst_12 = arith.constant 0.000000e+00 : f32
      %16 = vector.broadcast %cst_12 : f32 to vector<16x256xf32>
      %17 = arith.maximumf %15, %16 : vector<16x256xf32>
      %18 = arith.truncf %17 : vector<16x256xf32> to vector<16x256xbf16>
      %c0_13 = arith.constant 0 : index
      %c0_14 = arith.constant 0 : index
      %19 = vector.load %arg5[%c0_13, %c0_14] : memref<256x256xbf16, #tpu.memory_space<vmem>>, vector<256x256xbf16>
      %cst_15 = arith.constant dense<0.000000e+00> : vector<16x256xf32>
      %20 = tpu.matmul %18, %19, %cst_15 {dimension_numbers = #tpu.dot_dimension_numbers<[1], [0], [0], [1], [0, 0, 1, 1], [], []>} : vector<16x256xbf16>, vector<256x256xbf16>, vector<16x256xf32> -> vector<16x256xf32>
      %c0_16 = arith.constant 0 : index
      %c0_17 = arith.constant 0 : index
      %21 = vector.load %arg6[%c0_16, %c0_17] : memref<1x256xf32, #tpu.memory_space<vmem>>, vector<1x256xf32>
      %22 = vector.broadcast %21 : vector<1x256xf32> to vector<16x256xf32>
      %23 = arith.addf %20, %22 : vector<16x256xf32>
      %c0_18 = arith.constant 0 : index
      %c0_19 = arith.constant 0 : index
      %24 = vector.load %arg7[%c0_18, %c0_19] : memref<16x256xf32, #tpu.memory_space<vmem>>, vector<16x256xf32>
      tpu.vector_store %arg7[%c0_18, %c0_19], %23 {strides = array<i32>} : memref<16x256xf32, #tpu.memory_space<vmem>>, vector<16x256xf32>,
    } else {
    }
    return
  }
  func.func @transform_0(%arg0: i32, %arg1: i32) -> (i32, i32) {
    %c0_i32 = arith.constant 0 : i32
    return %arg0, %arg1 : i32, i32
  }
  func.func @transform_1(%arg0: i32, %arg1: i32) -> (i32, i32) {
    %c0_i32 = arith.constant 0 : i32
    %c0_i32_0 = arith.constant 0 : i32
    return %arg1, %c0_i32 : i32, i32
  }
  func.func @transform_2(%arg0: i32, %arg1: i32) -> (i32, i32) {
    %c0_i32 = arith.constant 0 : i32
    %c0_i32_0 = arith.constant 0 : i32
    %c0_i32_1 = arith.constant 0 : i32
    return %c0_i32, %c0_i32_0 : i32, i32
  }
  func.func @transform_3(%arg0: i32, %arg1: i32) -> (i32, i32) {
    %c0_i32 = arith.constant 0 : i32
    %c0_i32_0 = arith.constant 0 : i32
    %c0_i32_1 = arith.constant 0 : i32
    return %c0_i32, %c0_i32_0 : i32, i32
  }
  func.func @transform_4(%arg0: i32, %arg1: i32) -> (i32, i32) {
    %c0_i32 = arith.constant 0 : i32
    %c0_i32_0 = arith.constant 0 : i32
    %c0_i32_1 = arith.constant 0 : i32
    return %c0_i32, %c0_i32_0 : i32, i32
  }
  func.func @transform_5(%arg0: i32, %arg1: i32) -> (i32, i32) {
    %c0_i32 = arith.constant 0 : i32
    %c0_i32_0 = arith.constant 0 : i32
    return %arg0, %c0_i32 : i32, i32
  }
}

</mosaic_0001>

<llo_original>
// kernel: tpu_custom_call.1
$region0: #{tpu_custom_call.1}
  #allocation0 [shape = 'u32[]', space=smem, size = 0x4, offset = 0x4, fixed_abs, tag = 'smem constant byte address 0x4 - core index']
  #allocation1 [shape = 'u32[144,128]{1,0:T(1,128)}', space=vmem, size = 0x12000, scoped, tag = 'internal scratch']
  #allocation2 [shape = 'f32[16,256]{1,0:T(8,128)}', space=vmem, size = 0x4000, scoped, tag = 'scratch operand']
  %s0 = inlined_call_operand.hbm [shape: bf16[16,128], index: 0, kind: input, shape index: {}]
  %s1 = inlined_call_operand.hbm [shape: bf16[128,256], index: 1, kind: input, shape index: {}]
  %s2 = inlined_call_operand.vmem [shape: f32[1,256], index: 2, kind: input, shape index: {}]
  %s3 = inlined_call_operand.hbm [shape: bf16[256,256], index: 3, kind: input, shape index: {}]
  %s4 = inlined_call_operand.vmem [shape: f32[1,256], index: 4, kind: input, shape index: {}]
  %s5 = inlined_call_operand.hbm [shape: f32[16,256], index: 5, kind: output, shape index: {}]
  %s6 = sld [smem:[#allocation0]]
  $region54: #{tpu_custom_call.1} parent=0
    _
  %s8 = ssub.s32 1, %s6
  %s9 = scalar_select 0, %s8, %s6
  $region1: #{tpu_custom_call.1} parent=0
    #allocation3 [shape = 'u8[4096]{0}', space=vmem, size = 0x1000, scoped, tag = 'input window, operand 0, single buffered']
    #allocation4 [shape = 's32[1]{0}', space=sflag, size = 0x4, scoped, tag = 'scoped memory for tpu_custom_call.1']
    #allocation5 [shape = 's32[1]{0}', space=sflag, size = 0x4, scoped, tag = 'scoped memory for tpu_custom_call.1']
    #allocation6 [shape = 'u8[65536]{0}', space=vmem, size = 0x10000, scoped, tag = 'input window, operand 1, single buffered']
    #allocation7 [shape = 's32[1]{0}', space=sflag, size = 0x4, scoped, tag = 'scoped memory for tpu_custom_call.1']
    #allocation8 [shape = 'u8[131072]{0}', space=vmem, size = 0x20000, scoped, tag = 'input window, operand 3, single buffered']
    #allocation9 [shape = 'u8[16384]{0}', space=vmem, size = 0x4000, scoped, tag = 'output window, operand 0, single buffered']
    %10 = vsyncpa [#allocation4], 0
    %11 = vsyncpa [#allocation7], 0
    %12 = vsyncpa [#allocation5], 0
    // Predicated region
    $region2: #{tpu_custom_call.1} parent=1 // pred_check
      _
    $region3: #{tpu_custom_call.1} parent=1 // pred_check_branch
      %14 = sbr.rel (0) target = $region5
    $region4: #{tpu_custom_call.1} parent=1 // pred_region
      %s16 = ssub.s32 128, 128
      %17 = vsyncadd [#allocation4], %s16
      %s18 = sshll.u32 [#allocation3], 4
      %s19 = int_to_ptr.vmem [resolvable:$true] %s18
      %24 = dma.hbm_to_vmem [thread:$0]  %s0, 128, %s19, [#allocation4], 64, 64, 4
    $region5: #{tpu_custom_call.1} parent=1 // pred_fallthru
      _
    // Predicated region
    $region6: #{tpu_custom_call.1} parent=1 // pred_check
      _
    $region7: #{tpu_custom_call.1} parent=1 // pred_check_branch
      %26 = sbr.rel (0) target = $region9
    $region8: #{tpu_custom_call.1} parent=1 // pred_region
      %s28 = ssub.s32 2048, 2048
      %29 = vsyncadd [#allocation7], %s28
      %s30 = sshll.u32 [#allocation6], 4
      %s31 = int_to_ptr.vmem [resolvable:$true] %s30
      %36 = dma.hbm_to_vmem [thread:$0]  %s1, 2048, %s31, [#allocation7], 128, 128, 8
    $region9: #{tpu_custom_call.1} parent=1 // pred_fallthru
      _
    // Predicated region
    $region10: #{tpu_custom_call.1} parent=1 // pred_check
      _
    $region11: #{tpu_custom_call.1} parent=1 // pred_check_branch
      %38 = sbr.rel (0) target = $region13
    $region12: #{tpu_custom_call.1} parent=1 // pred_region
      _
    $region13: #{tpu_custom_call.1} parent=1 // pred_fallthru
      _
    // Predicated region
    $region14: #{tpu_custom_call.1} parent=1 // pred_check
      _
    $region15: #{tpu_custom_call.1} parent=1 // pred_check_branch
      %40 = sbr.rel (0) target = $region17
    $region16: #{tpu_custom_call.1} parent=1 // pred_region
      %s42 = ssub.s32 4096, 4096
      %43 = vsyncadd [#allocation7], %s42
      %s44 = sshll.u32 [#allocation8], 4
      %s45 = int_to_ptr.vmem [resolvable:$true] %s44
      %50 = dma.hbm_to_vmem [thread:$0]  %s3, 4096, %s45, [#allocation7], 128, 128, 8
    $region17: #{tpu_custom_call.1} parent=1 // pred_fallthru
      _
    // Predicated region
    $region18: #{tpu_custom_call.1} parent=1 // pred_check
      _
    $region19: #{tpu_custom_call.1} parent=1 // pred_check_branch
      %52 = sbr.rel (0) target = $region21
    $region20: #{tpu_custom_call.1} parent=1 // pred_region
      _
    $region21: #{tpu_custom_call.1} parent=1 // pred_fallthru
      _
    // Predicated region
    $region22: #{tpu_custom_call.1} parent=1 // pred_check
      _
    $region23: #{tpu_custom_call.1} parent=1 // pred_check_branch
      %54 = sbr.rel (0) target = $region25
    $region24: #{tpu_custom_call.1} parent=1 // pred_region
      %55 = dma.done [#allocation4], 128
    $region25: #{tpu_custom_call.1} parent=1 // pred_fallthru
      _
    // Predicated region
    $region26: #{tpu_custom_call.1} parent=1 // pred_check
      _
    $region27: #{tpu_custom_call.1} parent=1 // pred_check_branch
      %57 = sbr.rel (0) target = $region29
    $region28: #{tpu_custom_call.1} parent=1 // pred_region
      %58 = dma.done [#allocation7], 2048
    $region29: #{tpu_custom_call.1} parent=1 // pred_fallthru
      _
    // Predicated region
    $region30: #{tpu_custom_call.1} parent=1 // pred_check
      _
    $region31: #{tpu_custom_call.1} parent=1 // pred_check_branch
      %60 = sbr.rel (0) target = $region33
    $region32: #{tpu_custom_call.1} parent=1 // pred_region
      %61 = dma.done [#allocation7], 4096
    $region33: #{tpu_custom_call.1} parent=1 // pred_fallthru
      _
    %v63 = vld [vmem:[#allocation3] sm:$0xf]
    %v64 = vld [vmem:[#allocation3 + $0x4] sm:$0xf]
    %v65 = vld [vmem:[#allocation6] sm:$0xff]
    %v66 = vld [vmem:[#allocation6 + $0x8] sm:$0xff]
    %v67 = vld [vmem:[#allocation6 + $0x10] sm:$0xff]
    %v68 = vld [vmem:[#allocation6 + $0x18] sm:$0xff]
    %v69 = vld [vmem:[#allocation6 + $0x20] sm:$0xff]
    %v70 = vld [vmem:[#allocation6 + $0x28] sm:$0xff]
    %v71 = vld [vmem:[#allocation6 + $0x30] sm:$0xff]
    %v72 = vld [vmem:[#allocation6 + $0x38] sm:$0xff]
    %v73 = vld [vmem:[#allocation6 + $0x40] sm:$0xff]
    %v74 = vld [vmem:[#allocation6 + $0x48] sm:$0xff]
    %v75 = vld [vmem:[#allocation6 + $0x50] sm:$0xff]
    %v76 = vld [vmem:[#allocation6 + $0x58] sm:$0xff]
    %v77 = vld [vmem:[#allocation6 + $0x60] sm:$0xff]
    %v78 = vld [vmem:[#allocation6 + $0x68] sm:$0xff]
    %v79 = vld [vmem:[#allocation6 + $0x70] sm:$0xff]
    %v80 = vld [vmem:[#allocation6 + $0x78] sm:$0xff]
    %v83 = vunpack.c.l.b16 %v63
    %v84 = vunpack.c.l.b16 %v64
    %v85 = vpack.c.b16 %v84, %v83
    %v103 = vunpack.c.l.b16 %v65
    %v104 = vunpack.c.h.b16 %v65
    %v105 = vunpack.c.l.b16 %v66
    %v106 = vunpack.c.h.b16 %v66
    %v107 = vunpack.c.l.b16 %v67
    %v108 = vunpack.c.h.b16 %v67
    %v109 = vunpack.c.l.b16 %v68
    %v110 = vunpack.c.h.b16 %v68
    %v111 = vunpack.c.l.b16 %v69
    %v112 = vunpack.c.h.b16 %v69
    %v113 = vunpack.c.l.b16 %v70
    %v114 = vunpack.c.h.b16 %v70
    %v115 = vunpack.c.l.b16 %v71
    %v116 = vunpack.c.h.b16 %v71
    %v117 = vunpack.c.l.b16 %v72
    %v118 = vunpack.c.h.b16 %v72
    %v119 = vunpack.c.l.b16 %v73
    %v120 = vunpack.c.h.b16 %v73
    %v121 = vunpack.c.l.b16 %v74
    %v122 = vunpack.c.h.b16 %v74
    %v123 = vunpack.c.l.b16 %v75
    %v124 = vunpack.c.h.b16 %v75
    %v125 = vunpack.c.l.b16 %v76
    %v126 = vunpack.c.h.b16 %v76
    %v127 = vunpack.c.l.b16 %v77
    %v128 = vunpack.c.h.b16 %v77
    %v129 = vunpack.c.l.b16 %v78
    %v130 = vunpack.c.h.b16 %v78
    %v131 = vunpack.c.l.b16 %v79
    %v132 = vunpack.c.h.b16 %v79
    %v133 = vunpack.c.l.b16 %v80
    %v134 = vunpack.c.h.b16 %v80
    %v135 = vpack.c.b16 %v105, %v103
    %v136 = vpack.c.b16 %v106, %v104
    %v137 = vpack.c.b16 %v109, %v107
    %v138 = vpack.c.b16 %v110, %v108
    %v139 = vpack.c.b16 %v113, %v111
    %v140 = vpack.c.b16 %v114, %v112
    %v141 = vpack.c.b16 %v117, %v115
    %v142 = vpack.c.b16 %v118, %v116
    %v143 = vpack.c.b16 %v121, %v119
    %v144 = vpack.c.b16 %v122, %v120
    %v145 = vpack.c.b16 %v125, %v123
    %v146 = vpack.c.b16 %v126, %v124
    %v147 = vpack.c.b16 %v129, %v127
    %v148 = vpack.c.b16 %v130, %v128
    %v149 = vpack.c.b16 %v133, %v131
    %v150 = vpack.c.b16 %v134, %v132
    %167 = vmatprep.subr.bf16.mxu0 %v136
    %168 = vmatpush1.bf16.msra.mxu0 %v135
    %169 = vmatprep.subr.bf16.mxu0 %v138
    %170 = vmatpush1.bf16.msra.mxu0 %v137
    %171 = vmatprep.subr.bf16.mxu0 %v140
    %172 = vmatpush1.bf16.msra.mxu0 %v139
    %173 = vmatprep.subr.bf16.mxu0 %v142
    %174 = vmatpush1.bf16.msra.mxu0 %v141
    %175 = vmatprep.subr.bf16.mxu0 %v144
    %176 = vmatpush1.bf16.msra.mxu0 %v143
    %177 = vmatprep.subr.bf16.mxu0 %v146
    %178 = vmatpush1.bf16.msra.mxu0 %v145
    %179 = vmatprep.subr.bf16.mxu0 %v148
    %180 = vmatpush1.bf16.msra.mxu0 %v147
    %181 = vmatprep.subr.bf16.mxu0 %v150
    %182 = vmatpush1.bf16.msra.mxu0 %v149
    %183 = vmatprep.subr.bf16.mxu0 0
    %184 = vmatpush1.bf16.msra.mxu0 0
    %185 = vmatprep.subr.bf16.mxu0 0
    %186 = vmatpush1.bf16.msra.mxu0 0
    %187 = vmatprep.subr.bf16.mxu0 0
    %188 = vmatpush1.bf16.msra.mxu0 0
    %189 = vmatprep.subr.bf16.mxu0 0
    %190 = vmatpush1.bf16.msra.mxu0 0
    %191 = vmatprep.subr.bf16.mxu0 0
    %192 = vmatpush1.bf16.msra.mxu0 0
    %193 = vmatprep.subr.bf16.mxu0 0
    %194 = vmatpush1.bf16.msra.mxu0 0
    %195 = vmatprep.subr.bf16.mxu0 0
    %196 = vmatpush1.bf16.msra.mxu0 0
    %197 = vmatprep.subr.bf16.mxu0 0
    %198 = vmatpush1.bf16.msra.mxu0 0
    %199 = vmatprep.mubr.bf16.mxu0 0
    %200 = vmatmul.mubr.bf16.gmra.mrb[0].mxu0 %v85
    %v201 = vpop.f32.mrb[0].mxu0
    %v202 = vadd.f32 0.0, %v201
    %v203 = vpop.f32.mrb[0].mxu0
    %v204 = vadd.f32 0.0, %v203
    %v205 = vpop.f32.mrb[0].mxu0
    %v206 = vadd.f32 0.0, %v205
    %v207 = vpop.f32.mrb[0].mxu0
    %v208 = vadd.f32 0.0, %v207
    %209 = vdwg.mxu0
    %p210 = scmp.eq.s32.totalorder 0, 0
    // Predicated region
    $region34: #{tpu_custom_call.1} parent=1 // pred_check
      %p211 = pneg %p210
    $region35: #{tpu_custom_call.1} parent=1 // pred_check_branch
      %213 = sbr.rel (%p211) target = $region37
    $region36: #{tpu_custom_call.1} parent=1 // pred_region
      %214 = vst [vmem:[#allocation2] sm:$0xff] %v202
      %215 = vst [vmem:[#allocation2 + $0x8] sm:$0xff] %v204
      %216 = vst [vmem:[#allocation2 + $0x10] sm:$0xff] %v206
      %217 = vst [vmem:[#allocation2 + $0x18] sm:$0xff] %v208
    $region37: #{tpu_custom_call.1} parent=1 // pred_fallthru
      _
    %p218 = scmp.gt.s32.totalorder 0, 0
    // Predicated region
    $region38: #{tpu_custom_call.1} parent=1 // pred_check
      %p219 = pneg %p218
    $region39: #{tpu_custom_call.1} parent=1 // pred_check_branch
      %221 = sbr.rel (%p219) target = $region41
    $region40: #{tpu_custom_call.1} parent=1 // pred_region
      %v222 = vld [vmem:[#allocation2] sm:$0xff]
      %v223 = vld [vmem:[#allocation2 + $0x8] sm:$0xff]
      %v224 = vld [vmem:[#allocation2 + $0x10] sm:$0xff]
      %v225 = vld [vmem:[#allocation2 + $0x18] sm:$0xff]
      %v226 = vadd.f32 %v222, %v202
      %v227 = vadd.f32 %v223, %v204
      %v228 = vadd.f32 %v224, %v206
      %v229 = vadd.f32 %v225, %v208
      %230 = vst [vmem:[#allocation2] sm:$0xff] %v226
      %231 = vst [vmem:[#allocation2 + $0x8] sm:$0xff] %v227
      %232 = vst [vmem:[#allocation2 + $0x10] sm:$0xff] %v228
      %233 = vst [vmem:[#allocation2 + $0x18] sm:$0xff] %v229
    $region41: #{tpu_custom_call.1} parent=1 // pred_fallthru
      _
    // Predicated region
    $region42: #{tpu_custom_call.1} parent=1 // pred_check
      %p234 = pneg %p210
    $region43: #{tpu_custom_call.1} parent=1 // pred_check_branch
      %236 = sbr.rel (%p234) target = $region45
    $region44: #{tpu_custom_call.1} parent=1 // pred_region
      %v237 = vld [vmem:[#allocation2] sm:$0xff]
      %v238 = vld [vmem:[#allocation2 + $0x8] sm:$0xff]
      %v239 = vld [vmem:[#allocation2 + $0x10] sm:$0xff]
      %v240 = vld [vmem:[#allocation2 + $0x18] sm:$0xff]
      %v241 = vld [vmem:[%s2] sm:$0x3]
      %v243 = vlaneseq
      %v244 = vshrl.u32 %v243, 7
      %v245 = vsub.s32 0, %v244
      %v246 = vrot.slane %v241, %v245
      %v247 = vlaneseq
      %v248 = vshrl.u32 %v247, 7
      %v249 = vsub.s32 1, %v248
      %v250 = vrot.slane %v241, %v249
      %v253 = vadd.f32 %v237, %v246
      %v254 = vadd.f32 %v238, %v250
      %v255 = vadd.f32 %v239, %v246
      %v256 = vadd.f32 %v240, %v250
      %v257 = vmax.f32 %v253, 0.0
      %v258 = vmax.f32 %v254, 0.0
      %v259 = vmax.f32 %v255, 0.0
      %v260 = vmax.f32 %v256, 0.0
      %v261 = vpack.c.bf16 %v259, %v257
      %v262 = vpack.c.bf16 %v260, %v258
      %v263 = vld [vmem:[#allocation8] sm:$0xff]
      %v264 = vld [vmem:[#allocation8 + $0x8] sm:$0xff]
      %v265 = vld [vmem:[#allocation8 + $0x10] sm:$0xff]
      %v266 = vld [vmem:[#allocation8 + $0x18] sm:$0xff]
      %v267 = vld [vmem:[#allocation8 + $0x20] sm:$0xff]
      %v268 = vld [vmem:[#allocation8 + $0x28] sm:$0xff]
      %v269 = vld [vmem:[#allocation8 + $0x30] sm:$0xff]
      %v270 = vld [vmem:[#allocation8 + $0x38] sm:$0xff]
      %v271 = vld [vmem:[#allocation8 + $0x40] sm:$0xff]
      %v272 = vld [vmem:[#allocation8 + $0x48] sm:$0xff]
      %v273 = vld [vmem:[#allocation8 + $0x50] sm:$0xff]
      %v274 = vld [vmem:[#allocation8 + $0x58] sm:$0xff]
      %v275 = vld [vmem:[#allocation8 + $0x60] sm:$0xff]
      %v276 = vld [vmem:[#allocation8 + $0x68] sm:$0xff]
      %v277 = vld [vmem:[#allocation8 + $0x70] sm:$0xff]
      %v278 = vld [vmem:[#allocation8 + $0x78] sm:$0xff]
      %v279 = vld [vmem:[#allocation8 + $0x80] sm:$0xff]
      %v280 = vld [vmem:[#allocation8 + $0x88] sm:$0xff]
      %v281 = vld [vmem:[#allocation8 + $0x90] sm:$0xff]
      %v282 = vld [vmem:[#allocation8 + $0x98] sm:$0xff]
      %v283 = vld [vmem:[#allocation8 + $0xa0] sm:$0xff]
      %v284 = vld [vmem:[#allocation8 + $0xa8] sm:$0xff]
      %v285 = vld [vmem:[#allocation8 + $0xb0] sm:$0xff]
      %v286 = vld [vmem:[#allocation8 + $0xb8] sm:$0xff]
      %v287 = vld [vmem:[#allocation8 + $0xc0] sm:$0xff]
      %v288 = vld [vmem:[#allocation8 + $0xc8] sm:$0xff]
      %v289 = vld [vmem:[#allocation8 + $0xd0] sm:$0xff]
      %v290 = vld [vmem:[#allocation8 + $0xd8] sm:$0xff]
      %v291 = vld [vmem:[#allocation8 + $0xe0] sm:$0xff]
      %v292 = vld [vmem:[#allocation8 + $0xe8] sm:$0xff]
      %v293 = vld [vmem:[#allocation8 + $0xf0] sm:$0xff]
      %v294 = vld [vmem:[#allocation8 + $0xf8] sm:$0xff]
      %v295 = vld [vmem:[%s4] sm:$0x3]
      %v297 = vlaneseq
      %v298 = vshrl.u32 %v297, 7
      %v299 = vsub.s32 0, %v298
      %v300 = vrot.slane %v295, %v299
      %v301 = vlaneseq
      %v302 = vshrl.u32 %v301, 7
      %v303 = vsub.s32 1, %v302
      %v304 = vrot.slane %v295, %v303
      %v339 = vunpack.c.l.b16 %v263
      %v340 = vunpack.c.h.b16 %v263
      %v341 = vunpack.c.l.b16 %v264
      %v342 = vunpack.c.h.b16 %v264
      %v343 = vunpack.c.l.b16 %v265
      %v344 = vunpack.c.h.b16 %v265
      %v345 = vunpack.c.l.b16 %v266
      %v346 = vunpack.c.h.b16 %v266
      %v347 = vunpack.c.l.b16 %v267
      %v348 = vunpack.c.h.b16 %v267
      %v349 = vunpack.c.l.b16 %v268
      %v350 = vunpack.c.h.b16 %v268
      %v351 = vunpack.c.l.b16 %v269
      %v352 = vunpack.c.h.b16 %v269
      %v353 = vunpack.c.l.b16 %v270
      %v354 = vunpack.c.h.b16 %v270
      %v355 = vunpack.c.l.b16 %v271
      %v356 = vunpack.c.h.b16 %v271
      %v357 = vunpack.c.l.b16 %v272
      %v358 = vunpack.c.h.b16 %v272
      %v359 = vunpack.c.l.b16 %v273
      %v360 = vunpack.c.h.b16 %v273
      %v361 = vunpack.c.l.b16 %v274
      %v362 = vunpack.c.h.b16 %v274
      %v363 = vunpack.c.l.b16 %v275
      %v364 = vunpack.c.h.b16 %v275
      %v365 = vunpack.c.l.b16 %v276
      %v366 = vunpack.c.h.b16 %v276
      %v367 = vunpack.c.l.b16 %v277
      %v368 = vunpack.c.h.b16 %v277
      %v369 = vunpack.c.l.b16 %v278
      %v370 = vunpack.c.h.b16 %v278
      %v371 = vunpack.c.l.b16 %v279
      %v372 = vunpack.c.h.b16 %v279
      %v373 = vunpack.c.l.b16 %v280
      %v374 = vunpack.c.h.b16 %v280
      %v375 = vunpack.c.l.b16 %v281
      %v376 = vunpack.c.h.b16 %v281
      %v377 = vunpack.c.l.b16 %v282
      %v378 = vunpack.c.h.b16 %v282
      %v379 = vunpack.c.l.b16 %v283
      %v380 = vunpack.c.h.b16 %v283
      %v381 = vunpack.c.l.b16 %v284
      %v382 = vunpack.c.h.b16 %v284
      %v383 = vunpack.c.l.b16 %v285
      %v384 = vunpack.c.h.b16 %v285
      %v385 = vunpack.c.l.b16 %v286
      %v386 = vunpack.c.h.b16 %v286
      %v387 = vunpack.c.l.b16 %v287
      %v388 = vunpack.c.h.b16 %v287
      %v389 = vunpack.c.l.b16 %v288
      %v390 = vunpack.c.h.b16 %v288
      %v391 = vunpack.c.l.b16 %v289
      %v392 = vunpack.c.h.b16 %v289
      %v393 = vunpack.c.l.b16 %v290
      %v394 = vunpack.c.h.b16 %v290
      %v395 = vunpack.c.l.b16 %v291
      %v396 = vunpack.c.h.b16 %v291
      %v397 = vunpack.c.l.b16 %v292
      %v398 = vunpack.c.h.b16 %v292
      %v399 = vunpack.c.l.b16 %v293
      %v400 = vunpack.c.h.b16 %v293
      %v401 = vunpack.c.l.b16 %v294
      %v402 = vunpack.c.h.b16 %v294
      %v403 = vpack.c.b16 %v341, %v339
      %v404 = vpack.c.b16 %v342, %v340
      %v405 = vpack.c.b16 %v345, %v343
      %v406 = vpack.c.b16 %v346, %v344
      %v407 = vpack.c.b16 %v349, %v347
      %v408 = vpack.c.b16 %v350, %v348
      %v409 = vpack.c.b16 %v353, %v351
      %v410 = vpack.c.b16 %v354, %v352
      %v411 = vpack.c.b16 %v357, %v355
      %v412 = vpack.c.b16 %v358, %v356
      %v413 = vpack.c.b16 %v361, %v359
      %v414 = vpack.c.b16 %v362, %v360
      %v415 = vpack.c.b16 %v365, %v363
      %v416 = vpack.c.b16 %v366, %v364
      %v417 = vpack.c.b16 %v369, %v367
      %v418 = vpack.c.b16 %v370, %v368
      %v419 = vpack.c.b16 %v373, %v371
      %v420 = vpack.c.b16 %v374, %v372
      %v421 = vpack.c.b16 %v377, %v375
      %v422 = vpack.c.b16 %v378, %v376
      %v423 = vpack.c.b16 %v381, %v379
      %v424 = vpack.c.b16 %v382, %v380
      %v425 = vpack.c.b16 %v385, %v383
      %v426 = vpack.c.b16 %v386, %v384
      %v427 = vpack.c.b16 %v389, %v387
      %v428 = vpack.c.b16 %v390, %v388
      %v429 = vpack.c.b16 %v393, %v391
      %v430 = vpack.c.b16 %v394, %v392
      %v431 = vpack.c.b16 %v397, %v395
      %v432 = vpack.c.b16 %v398, %v396
      %v433 = vpack.c.b16 %v401, %v399
      %v434 = vpack.c.b16 %v402, %v400
      %467 = vmatprep.subr.bf16.mxu0 %v404
      %468 = vmatpush1.bf16.msra.mxu0 %v403
      %469 = vmatprep.subr.bf16.mxu0 %v406
      %470 = vmatpush1.bf16.msra.mxu0 %v405
      %471 = vmatprep.subr.bf16.mxu0 %v408
      %472 = vmatpush1.bf16.msra.mxu0 %v407
      %473 = vmatprep.subr.bf16.mxu0 %v410
      %474 = vmatpush1.bf16.msra.mxu0 %v409
      %475 = vmatprep.subr.bf16.mxu0 %v412
      %476 = vmatpush1.bf16.msra.mxu0 %v411
      %477 = vmatprep.subr.bf16.mxu0 %v414
      %478 = vmatpush1.bf16.msra.mxu0 %v413
      %479 = vmatprep.subr.bf16.mxu0 %v416
      %480 = vmatpush1.bf16.msra.mxu0 %v415
      %481 = vmatprep.subr.bf16.mxu0 %v418
      %482 = vmatpush1.bf16.msra.mxu0 %v417
      %483 = vmatprep.subr.bf16.mxu0 %v420
      %484 = vmatpush1.bf16.msra.mxu0 %v419
      %485 = vmatprep.subr.bf16.mxu0 %v422
      %486 = vmatpush1.bf16.msra.mxu0 %v421
      %487 = vmatprep.subr.bf16.mxu0 %v424
      %488 = vmatpush1.bf16.msra.mxu0 %v423
      %489 = vmatprep.subr.bf16.mxu0 %v426
      %490 = vmatpush1.bf16.msra.mxu0 %v425
      %491 = vmatprep.subr.bf16.mxu0 %v428
      %492 = vmatpush1.bf16.msra.mxu0 %v427
      %493 = vmatprep.subr.bf16.mxu0 %v430
      %494 = vmatpush1.bf16.msra.mxu0 %v429
      %495 = vmatprep.subr.bf16.mxu0 %v432
      %496 = vmatpush1.bf16.msra.mxu0 %v431
      %497 = vmatprep.subr.bf16.mxu0 %v434
      %498 = vmatpush1.bf16.msra.mxu0 %v433
      %499 = vmatprep.mubr.bf16.mxu0 %v262
      %500 = vmatmul.mubr.bf16.gmra.mrb[0].mxu0 %v261
      %v501 = vpop.f32.mrb[0].mxu0
      %v502 = vadd.f32 %v300, %v501
      %v503 = vpop.f32.mrb[0].mxu0
      %v504 = vadd.f32 %v304, %v503
      %v505 = vpop.f32.mrb[0].mxu0
      %v506 = vadd.f32 %v300, %v505
      %v507 = vpop.f32.mrb[0].mxu0
      %v508 = vadd.f32 %v304, %v507
      %509 = vdwg.mxu0
      %510 = vst [vmem:[#allocation9] sm:$0xff] %v502
      %511 = vst [vmem:[#allocation9 + $0x8] sm:$0xff] %v504
      %512 = vst [vmem:[#allocation9 + $0x10] sm:$0xff] %v506
      %513 = vst [vmem:[#allocation9 + $0x18] sm:$0xff] %v508
    $region45: #{tpu_custom_call.1} parent=1 // pred_fallthru
      _
    // Predicated region
    $region46: #{tpu_custom_call.1} parent=1 // pred_check
      _
    $region47: #{tpu_custom_call.1} parent=1 // pred_check_branch
      %515 = sbr.rel (0) target = $region49
    $region48: #{tpu_custom_call.1} parent=1 // pred_region
      %s517 = ssub.s32 512, 512
      %518 = vsyncadd [#allocation5], %s517
      %s519 = sshll.u32 [#allocation9], 4
      %s520 = int_to_ptr.vmem [resolvable:$true] %s519
      %525 = dma.vmem_to_hbm [thread:$0]  %s520, 512, %s5, [#allocation5], 256, 256, 16
    $region49: #{tpu_custom_call.1} parent=1 // pred_fallthru
      _
    // Predicated region
    $region50: #{tpu_custom_call.1} parent=1 // pred_check
      _
    $region51: #{tpu_custom_call.1} parent=1 // pred_check_branch
      %527 = sbr.rel (0) target = $region53
    $region52: #{tpu_custom_call.1} parent=1 // pred_region
      %528 = dma.done [#allocation5], 512
    $region53: #{tpu_custom_call.1} parent=1 // pred_fallthru
      _
    %529 = vsyncpa [#allocation4], 1
    %530 = vsyncpa [#allocation7], 1
    %531 = vsyncpa [#allocation5], 1

// kernel: tpu_custom_call.1
$region0: #{tpu_custom_call.1}
  #allocation0 [shape = 'u32[]', space=smem, size = 0x4, offset = 0x4, fixed_abs, tag = 'smem constant byte address 0x4 - core index']
  #allocation1 [shape = 'u32[144,128]{1,0:T(1,128)}', space=vmem, size = 0x12000, scoped, tag = 'internal scratch']
  #allocation2 [shape = 'f32[16,256]{1,0:T(8,128)}', space=vmem, size = 0x4000, scoped, tag = 'scratch operand']
  %s0 = inlined_call_operand.hbm [shape: bf16[16,128], index: 0, kind: input, shape index: {}]
  %s1 = inlined_call_operand.hbm [shape: bf16[128,256], index: 1, kind: input, shape index: {}]
  %s2 = inlined_call_operand.vmem [shape: f32[1,256], index: 2, kind: input, shape index: {}]
  %s3 = inlined_call_operand.hbm [shape: bf16[256,256], index: 3, kind: input, shape index: {}]
  %s4 = inlined_call_operand.vmem [shape: f32[1,256], index: 4, kind: input, shape index: {}]
  %s5 = inlined_call_operand.hbm [shape: f32[16,256], index: 5, kind: output, shape index: {}]
  %s6 = sld [smem:[#allocation0]]
  $region54: #{tpu_custom_call.1} parent=0
    _
  %s8 = ssub.s32 1, %s6
  %s9 = scalar_select 0, %s8, %s6
  $region1: #{tpu_custom_call.1} parent=0
    #allocation3 [shape = 'u8[4096]{0}', space=vmem, size = 0x1000, scoped, tag = 'input window, operand 0, single buffered']
    #allocation4 [shape = 's32[1]{0}', space=sflag, size = 0x4, scoped, tag = 'scoped memory for tpu_custom_call.1']
    #allocation5 [shape = 's32[1]{0}', space=sflag, size = 0x4, scoped, tag = 'scoped memory for tpu_custom_call.1']
    #allocation6 [shape = 'u8[65536]{0}', space=vmem, size = 0x10000, scoped, tag = 'input window, operand 1, single buffered']
    #allocation7 [shape = 's32[1]{0}', space=sflag, size = 0x4, scoped, tag = 'scoped memory for tpu_custom_call.1']
    #allocation8 [shape = 'u8[131072]{0}', space=vmem, size = 0x20000, scoped, tag = 'input window, operand 3, single buffered']
    #allocation9 [shape = 'u8[16384]{0}', space=vmem, size = 0x4000, scoped, tag = 'output window, operand 0, single buffered']
    %10 = vsyncpa [#allocation4], 0
    %11 = vsyncpa [#allocation7], 0
    %12 = vsyncpa [#allocation5], 0
    // Predicated region
    $region2: #{tpu_custom_call.1} parent=1 // pred_check
      _
    $region3: #{tpu_custom_call.1} parent=1 // pred_check_branch
      %14 = sbr.rel (0) target = $region5
    $region4: #{tpu_custom_call.1} parent=1 // pred_region
      %s16 = ssub.s32 128, 128
      %17 = vsyncadd [#allocation4], %s16
      %s18 = sshll.u32 [#allocation3], 4
      %s19 = int_to_ptr.vmem [resolvable:$true] %s18
      %24 = dma.hbm_to_vmem [thread:$0]  %s0, 128, %s19, [#allocation4], 64, 64, 4
    $region5: #{tpu_custom_call.1} parent=1 // pred_fallthru
      _
    // Predicated region
    $region6: #{tpu_custom_call.1} parent=1 // pred_check
      _
    $region7: #{tpu_custom_call.1} parent=1 // pred_check_branch
      %26 = sbr.rel (0) target = $region9
    $region8: #{tpu_custom_call.1} parent=1 // pred_region
      %s28 = ssub.s32 2048, 2048
      %29 = vsyncadd [#allocation7], %s28
      %s30 = sshll.u32 [#allocation6], 4
      %s31 = int_to_ptr.vmem [resolvable:$true] %s30
      %36 = dma.hbm_to_vmem [thread:$0]  %s1, 2048, %s31, [#allocation7], 128, 128, 8
    $region9: #{tpu_custom_call.1} parent=1 // pred_fallthru
      _
    // Predicated region
    $region10: #{tpu_custom_call.1} parent=1 // pred_check
      _
    $region11: #{tpu_custom_call.1} parent=1 // pred_check_branch
      %38 = sbr.rel (0) target = $region13
    $region12: #{tpu_custom_call.1} parent=1 // pred_region
      _
    $region13: #{tpu_custom_call.1} parent=1 // pred_fallthru
      _
    // Predicated region
    $region14: #{tpu_custom_call.1} parent=1 // pred_check
      _
    $region15: #{tpu_custom_call.1} parent=1 // pred_check_branch
      %40 = sbr.rel (0) target = $region17
    $region16: #{tpu_custom_call.1} parent=1 // pred_region
      %s42 = ssub.s32 4096, 4096
      %43 = vsyncadd [#allocation7], %s42
      %s44 = sshll.u32 [#allocation8], 4
      %s45 = int_to_ptr.vmem [resolvable:$true] %s44
      %50 = dma.hbm_to_vmem [thread:$0]  %s3, 4096, %s45, [#allocation7], 128, 128, 8
    $region17: #{tpu_custom_call.1} parent=1 // pred_fallthru
      _
    // Predicated region
    $region18: #{tpu_custom_call.1} parent=1 // pred_check
      _
    $region19: #{tpu_custom_call.1} parent=1 // pred_check_branch
      %52 = sbr.rel (0) target = $region21
    $region20: #{tpu_custom_call.1} parent=1 // pred_region
      _
    $region21: #{tpu_custom_call.1} parent=1 // pred_fallthru
      _
    // Predicated region
    $region22: #{tpu_custom_call.1} parent=1 // pred_check
      _
    $region23: #{tpu_custom_call.1} parent=1 // pred_check_branch
      %54 = sbr.rel (0) target = $region25
    $region24: #{tpu_custom_call.1} parent=1 // pred_region
      %55 = dma.done [#allocation4], 128
    $region25: #{tpu_custom_call.1} parent=1 // pred_fallthru
      _
    // Predicated region
    $region26: #{tpu_custom_call.1} parent=1 // pred_check
      _
    $region27: #{tpu_custom_call.1} parent=1 // pred_check_branch
      %57 = sbr.rel (0) target = $region29
    $region28: #{tpu_custom_call.1} parent=1 // pred_region
      %58 = dma.done [#allocation7], 2048
    $region29: #{tpu_custom_call.1} parent=1 // pred_fallthru
      _
    // Predicated region
    $region30: #{tpu_custom_call.1} parent=1 // pred_check
      _
    $region31: #{tpu_custom_call.1} parent=1 // pred_check_branch
      %60 = sbr.rel (0) target = $region33
    $region32: #{tpu_custom_call.1} parent=1 // pred_region
      %61 = dma.done [#allocation7], 4096
    $region33: #{tpu_custom_call.1} parent=1 // pred_fallthru
      _
    %v63 = vld [vmem:[#allocation3] sm:$0xf]
    %v64 = vld [vmem:[#allocation3 + $0x4] sm:$0xf]
    %v65 = vld [vmem:[#allocation6] sm:$0xff]
    %v66 = vld [vmem:[#allocation6 + $0x8] sm:$0xff]
    %v67 = vld [vmem:[#allocation6 + $0x10] sm:$0xff]
    %v68 = vld [vmem:[#allocation6 + $0x18] sm:$0xff]
    %v69 = vld [vmem:[#allocation6 + $0x20] sm:$0xff]
    %v70 = vld [vmem:[#allocation6 + $0x28] sm:$0xff]
    %v71 = vld [vmem:[#allocation6 + $0x30] sm:$0xff]
    %v72 = vld [vmem:[#allocation6 + $0x38] sm:$0xff]
    %v73 = vld [vmem:[#allocation6 + $0x40] sm:$0xff]
    %v74 = vld [vmem:[#allocation6 + $0x48] sm:$0xff]
    %v75 = vld [vmem:[#allocation6 + $0x50] sm:$0xff]
    %v76 = vld [vmem:[#allocation6 + $0x58] sm:$0xff]
    %v77 = vld [vmem:[#allocation6 + $0x60] sm:$0xff]
    %v78 = vld [vmem:[#allocation6 + $0x68] sm:$0xff]
    %v79 = vld [vmem:[#allocation6 + $0x70] sm:$0xff]
    %v80 = vld [vmem:[#allocation6 + $0x78] sm:$0xff]
    %v83 = vunpack.c.l.b16 %v63
    %v84 = vunpack.c.l.b16 %v64
    %v85 = vpack.c.b16 %v84, %v83
    %v103 = vunpack.c.l.b16 %v65
    %v104 = vunpack.c.h.b16 %v65
    %v105 = vunpack.c.l.b16 %v66
    %v106 = vunpack.c.h.b16 %v66
    %v107 = vunpack.c.l.b16 %v67
    %v108 = vunpack.c.h.b16 %v67
    %v109 = vunpack.c.l.b16 %v68
    %v110 = vunpack.c.h.b16 %v68
    %v111 = vunpack.c.l.b16 %v69
    %v112 = vunpack.c.h.b16 %v69
    %v113 = vunpack.c.l.b16 %v70
    %v114 = vunpack.c.h.b16 %v70
    %v115 = vunpack.c.l.b16 %v71
    %v116 = vunpack.c.h.b16 %v71
    %v117 = vunpack.c.l.b16 %v72
    %v118 = vunpack.c.h.b16 %v72
    %v119 = vunpack.c.l.b16 %v73
    %v120 = vunpack.c.h.b16 %v73
    %v121 = vunpack.c.l.b16 %v74
    %v122 = vunpack.c.h.b16 %v74
    %v123 = vunpack.c.l.b16 %v75
    %v124 = vunpack.c.h.b16 %v75
    %v125 = vunpack.c.l.b16 %v76
    %v126 = vunpack.c.h.b16 %v76
    %v127 = vunpack.c.l.b16 %v77
    %v128 = vunpack.c.h.b16 %v77
    %v129 = vunpack.c.l.b16 %v78
    %v130 = vunpack.c.h.b16 %v78
    %v131 = vunpack.c.l.b16 %v79
    %v132 = vunpack.c.h.b16 %v79
    %v133 = vunpack.c.l.b16 %v80
    %v134 = vunpack.c.h.b16 %v80
    %v135 = vpack.c.b16 %v105, %v103
    %v136 = vpack.c.b16 %v106, %v104
    %v137 = vpack.c.b16 %v109, %v107
    %v138 = vpack.c.b16 %v110, %v108
    %v139 = vpack.c.b16 %v113, %v111
    %v140 = vpack.c.b16 %v114, %v112
    %v141 = vpack.c.b16 %v117, %v115
    %v142 = vpack.c.b16 %v118, %v116
    %v143 = vpack.c.b16 %v121, %v119
    %v144 = vpack.c.b16 %v122, %v120
    %v145 = vpack.c.b16 %v125, %v123
    %v146 = vpack.c.b16 %v126, %v124
    %v147 = vpack.c.b16 %v129, %v127
    %v148 = vpack.c.b16 %v130, %v128
    %v149 = vpack.c.b16 %v133, %v131
    %v150 = vpack.c.b16 %v134, %v132
    %167 = vmatprep.subr.bf16.mxu0 %v136
    %168 = vmatpush1.bf16.msra.mxu0 %v135
    %169 = vmatprep.subr.bf16.mxu0 %v138
    %170 = vmatpush1.bf16.msra.mxu0 %v137
    %171 = vmatprep.subr.bf16.mxu0 %v140
    %172 = vmatpush1.bf16.msra.mxu0 %v139
    %173 = vmatprep.subr.bf16.mxu0 %v142
    %174 = vmatpush1.bf16.msra.mxu0 %v141
    %175 = vmatprep.subr.bf16.mxu0 %v144
    %176 = vmatpush1.bf16.msra.mxu0 %v143
    %177 = vmatprep.subr.bf16.mxu0 %v146
    %178 = vmatpush1.bf16.msra.mxu0 %v145
    %179 = vmatprep.subr.bf16.mxu0 %v148
    %180 = vmatpush1.bf16.msra.mxu0 %v147
    %181 = vmatprep.subr.bf16.mxu0 %v150
    %182 = vmatpush1.bf16.msra.mxu0 %v149
    %183 = vmatprep.subr.bf16.mxu0 0
    %184 = vmatpush1.bf16.msra.mxu0 0
    %185 = vmatprep.subr.bf16.mxu0 0
    %186 = vmatpush1.bf16.msra.mxu0 0
    %187 = vmatprep.subr.bf16.mxu0 0
    %188 = vmatpush1.bf16.msra.mxu0 0
    %189 = vmatprep.subr.bf16.mxu0 0
    %190 = vmatpush1.bf16.msra.mxu0 0
    %191 = vmatprep.subr.bf16.mxu0 0
    %192 = vmatpush1.bf16.msra.mxu0 0
    %193 = vmatprep.subr.bf16.mxu0 0
    %194 = vmatpush1.bf16.msra.mxu0 0
    %195 = vmatprep.subr.bf16.mxu0 0
    %196 = vmatpush1.bf16.msra.mxu0 0
    %197 = vmatprep.subr.bf16.mxu0 0
    %198 = vmatpush1.bf16.msra.mxu0 0
    %199 = vmatprep.mubr.bf16.mxu0 0
    %200 = vmatmul.mubr.bf16.gmra.mrb[0].mxu0 %v85
    %v201 = vpop.f32.mrb[0].mxu0
    %v202 = vadd.f32 0.0, %v201
    %v203 = vpop.f32.mrb[0].mxu0
    %v204 = vadd.f32 0.0, %v203
    %v205 = vpop.f32.mrb[0].mxu0
    %v206 = vadd.f32 0.0, %v205
    %v207 = vpop.f32.mrb[0].mxu0
    %v208 = vadd.f32 0.0, %v207
    %209 = vdwg.mxu0
    %p210 = scmp.eq.s32.totalorder 0, 0
    // Predicated region
    $region34: #{tpu_custom_call.1} parent=1 // pred_check
      %p211 = pneg %p210
    $region35: #{tpu_custom_call.1} parent=1 // pred_check_branch
      %213 = sbr.rel (%p211) target = $region37
    $region36: #{tpu_custom_call.1} parent=1 // pred_region
      %214 = vst [vmem:[#allocation2] sm:$0xff] %v202
      %215 = vst [vmem:[#allocation2 + $0x8] sm:$0xff] %v204
      %216 = vst [vmem:[#allocation2 + $0x10] sm:$0xff] %v206
      %217 = vst [vmem:[#allocation2 + $0x18] sm:$0xff] %v208
    $region37: #{tpu_custom_call.1} parent=1 // pred_fallthru
      _
    %p218 = scmp.gt.s32.totalorder 0, 0
    // Predicated region
    $region38: #{tpu_custom_call.1} parent=1 // pred_check
      %p219 = pneg %p218
    $region39: #{tpu_custom_call.1} parent=1 // pred_check_branch
      %221 = sbr.rel (%p219) target = $region41
    $region40: #{tpu_custom_call.1} parent=1 // pred_region
      %v222 = vld [vmem:[#allocation2] sm:$0xff]
      %v223 = vld [vmem:[#allocation2 + $0x8] sm:$0xff]
      %v224 = vld [vmem:[#allocation2 + $0x10] sm:$0xff]
      %v225 = vld [vmem:[#allocation2 + $0x18] sm:$0xff]
      %v226 = vadd.f32 %v222, %v202
      %v227 = vadd.f32 %v223, %v204
      %v228 = vadd.f32 %v224, %v206
      %v229 = vadd.f32 %v225, %v208
      %230 = vst [vmem:[#allocation2] sm:$0xff] %v226
      %231 = vst [vmem:[#allocation2 + $0x8] sm:$0xff] %v227
      %232 = vst [vmem:[#allocation2 + $0x10] sm:$0xff] %v228
      %233 = vst [vmem:[#allocation2 + $0x18] sm:$0xff] %v229
    $region41: #{tpu_custom_call.1} parent=1 // pred_fallthru
      _
    // Predicated region
    $region42: #{tpu_custom_call.1} parent=1 // pred_check
      %p234 = pneg %p210
    $region43: #{tpu_custom_call.1} parent=1 // pred_check_branch
      %236 = sbr.rel (%p234) target = $region45
    $region44: #{tpu_custom_call.1} parent=1 // pred_region
      %v237 = vld [vmem:[#allocation2] sm:$0xff]
      %v238 = vld [vmem:[#allocation2 + $0x8] sm:$0xff]
      %v239 = vld [vmem:[#allocation2 + $0x10] sm:$0xff]
      %v240 = vld [vmem:[#allocation2 + $0x18] sm:$0xff]
      %v241 = vld [vmem:[%s2] sm:$0x3]
      %v243 = vlaneseq
      %v244 = vshrl.u32 %v243, 7
      %v245 = vsub.s32 0, %v244
      %v246 = vrot.slane %v241, %v245
      %v247 = vlaneseq
      %v248 = vshrl.u32 %v247, 7
      %v249 = vsub.s32 1, %v248
      %v250 = vrot.slane %v241, %v249
      %v253 = vadd.f32 %v237, %v246
      %v254 = vadd.f32 %v238, %v250
      %v255 = vadd.f32 %v239, %v246
      %v256 = vadd.f32 %v240, %v250
      %v257 = vmax.f32 %v253, 0.0
      %v258 = vmax.f32 %v254, 0.0
      %v259 = vmax.f32 %v255, 0.0
      %v260 = vmax.f32 %v256, 0.0
      %v261 = vpack.c.bf16 %v259, %v257
      %v262 = vpack.c.bf16 %v260, %v258
      %v263 = vld [vmem:[#allocation8] sm:$0xff]
      %v264 = vld [vmem:[#allocation8 + $0x8] sm:$0xff]
      %v265 = vld [vmem:[#allocation8 + $0x10] sm:$0xff]
      %v266 = vld [vmem:[#allocation8 + $0x18] sm:$0xff]
      %v267 = vld [vmem:[#allocation8 + $0x20] sm:$0xff]
      %v268 = vld [vmem:[#allocation8 + $0x28] sm:$0xff]
      %v269 = vld [vmem:[#allocation8 + $0x30] sm:$0xff]
      %v270 = vld [vmem:[#allocation8 + $0x38] sm:$0xff]
      %v271 = vld [vmem:[#allocation8 + $0x40] sm:$0xff]
      %v272 = vld [vmem:[#allocation8 + $0x48] sm:$0xff]
      %v273 = vld [vmem:[#allocation8 + $0x50] sm:$0xff]
      %v274 = vld [vmem:[#allocation8 + $0x58] sm:$0xff]
      %v275 = vld [vmem:[#allocation8 + $0x60] sm:$0xff]
      %v276 = vld [vmem:[#allocation8 + $0x68] sm:$0xff]
      %v277 = vld [vmem:[#allocation8 + $0x70] sm:$0xff]
      %v278 = vld [vmem:[#allocation8 + $0x78] sm:$0xff]
      %v279 = vld [vmem:[#allocation8 + $0x80] sm:$0xff]
      %v280 = vld [vmem:[#allocation8 + $0x88] sm:$0xff]
      %v281 = vld [vmem:[#allocation8 + $0x90] sm:$0xff]
      %v282 = vld [vmem:[#allocation8 + $0x98] sm:$0xff]
      %v283 = vld [vmem:[#allocation8 + $0xa0] sm:$0xff]
      %v284 = vld [vmem:[#allocation8 + $0xa8] sm:$0xff]
      %v285 = vld [vmem:[#allocation8 + $0xb0] sm:$0xff]
      %v286 = vld [vmem:[#allocation8 + $0xb8] sm:$0xff]
      %v287 = vld [vmem:[#allocation8 + $0xc0] sm:$0xff]
      %v288 = vld [vmem:[#allocation8 + $0xc8] sm:$0xff]
      %v289 = vld [vmem:[#allocation8 + $0xd0] sm:$0xff]
      %v290 = vld [vmem:[#allocation8 + $0xd8] sm:$0xff]
      %v291 = vld [vmem:[#allocation8 + $0xe0] sm:$0xff]
      %v292 = vld [vmem:[#allocation8 + $0xe8] sm:$0xff]
      %v293 = vld [vmem:[#allocation8 + $0xf0] sm:$0xff]
      %v294 = vld [vmem:[#allocation8 + $0xf8] sm:$0xff]
      %v295 = vld [vmem:[%s4] sm:$0x3]
      %v297 = vlaneseq
      %v298 = vshrl.u32 %v297, 7
      %v299 = vsub.s32 0, %v298
      %v300 = vrot.slane %v295, %v299
      %v301 = vlaneseq
      %v302 = vshrl.u32 %v301, 7
      %v303 = vsub.s32 1, %v302
      %v304 = vrot.slane %v295, %v303
      %v339 = vunpack.c.l.b16 %v263
      %v340 = vunpack.c.h.b16 %v263
      %v341 = vunpack.c.l.b16 %v264
      %v342 = vunpack.c.h.b16 %v264
      %v343 = vunpack.c.l.b16 %v265
      %v344 = vunpack.c.h.b16 %v265
      %v345 = vunpack.c.l.b16 %v266
      %v346 = vunpack.c.h.b16 %v266
      %v347 = vunpack.c.l.b16 %v267
      %v348 = vunpack.c.h.b16 %v267
      %v349 = vunpack.c.l.b16 %v268
      %v350 = vunpack.c.h.b16 %v268
      %v351 = vunpack.c.l.b16 %v269
      %v352 = vunpack.c.h.b16 %v269
      %v353 = vunpack.c.l.b16 %v270
      %v354 = vunpack.c.h.b16 %v270
      %v355 = vunpack.c.l.b16 %v271
      %v356 = vunpack.c.h.b16 %v271
      %v357 = vunpack.c.l.b16 %v272
      %v358 = vunpack.c.h.b16 %v272
      %v359 = vunpack.c.l.b16 %v273
      %v360 = vunpack.c.h.b16 %v273
      %v361 = vunpack.c.l.b16 %v274
      %v362 = vunpack.c.h.b16 %v274
      %v363 = vunpack.c.l.b16 %v275
      %v364 = vunpack.c.h.b16 %v275
      %v365 = vunpack.c.l.b16 %v276
      %v366 = vunpack.c.h.b16 %v276
      %v367 = vunpack.c.l.b16 %v277
      %v368 = vunpack.c.h.b16 %v277
      %v369 = vunpack.c.l.b16 %v278
      %v370 = vunpack.c.h.b16 %v278
      %v371 = vunpack.c.l.b16 %v279
      %v372 = vunpack.c.h.b16 %v279
      %v373 = vunpack.c.l.b16 %v280
      %v374 = vunpack.c.h.b16 %v280
      %v375 = vunpack.c.l.b16 %v281
      %v376 = vunpack.c.h.b16 %v281
      %v377 = vunpack.c.l.b16 %v282
      %v378 = vunpack.c.h.b16 %v282
      %v379 = vunpack.c.l.b16 %v283
      %v380 = vunpack.c.h.b16 %v283
      %v381 = vunpack.c.l.b16 %v284
      %v382 = vunpack.c.h.b16 %v284
      %v383 = vunpack.c.l.b16 %v285
      %v384 = vunpack.c.h.b16 %v285
      %v385 = vunpack.c.l.b16 %v286
      %v386 = vunpack.c.h.b16 %v286
      %v387 = vunpack.c.l.b16 %v287
      %v388 = vunpack.c.h.b16 %v287
      %v389 = vunpack.c.l.b16 %v288
      %v390 = vunpack.c.h.b16 %v288
      %v391 = vunpack.c.l.b16 %v289
      %v392 = vunpack.c.h.b16 %v289
      %v393 = vunpack.c.l.b16 %v290
      %v394 = vunpack.c.h.b16 %v290
      %v395 = vunpack.c.l.b16 %v291
      %v396 = vunpack.c.h.b16 %v291
      %v397 = vunpack.c.l.b16 %v292
      %v398 = vunpack.c.h.b16 %v292
      %v399 = vunpack.c.l.b16 %v293
      %v400 = vunpack.c.h.b16 %v293
      %v401 = vunpack.c.l.b16 %v294
      %v402 = vunpack.c.h.b16 %v294
      %v403 = vpack.c.b16 %v341, %v339
      %v404 = vpack.c.b16 %v342, %v340
      %v405 = vpack.c.b16 %v345, %v343
      %v406 = vpack.c.b16 %v346, %v344
      %v407 = vpack.c.b16 %v349, %v347
      %v408 = vpack.c.b16 %v350, %v348
      %v409 = vpack.c.b16 %v353, %v351
      %v410 = vpack.c.b16 %v354, %v352
      %v411 = vpack.c.b16 %v357, %v355
      %v412 = vpack.c.b16 %v358, %v356
      %v413 = vpack.c.b16 %v361, %v359
      %v414 = vpack.c.b16 %v362, %v360
      %v415 = vpack.c.b16 %v365, %v363
      %v416 = vpack.c.b16 %v366, %v364
      %v417 = vpack.c.b16 %v369, %v367
      %v418 = vpack.c.b16 %v370, %v368
      %v419 = vpack.c.b16 %v373, %v371
      %v420 = vpack.c.b16 %v374, %v372
      %v421 = vpack.c.b16 %v377, %v375
      %v422 = vpack.c.b16 %v378, %v376
      %v423 = vpack.c.b16 %v381, %v379
      %v424 = vpack.c.b16 %v382, %v380
      %v425 = vpack.c.b16 %v385, %v383
      %v426 = vpack.c.b16 %v386, %v384
      %v427 = vpack.c.b16 %v389, %v387
      %v428 = vpack.c.b16 %v390, %v388
      %v429 = vpack.c.b16 %v393, %v391
      %v430 = vpack.c.b16 %v394, %v392
      %v431 = vpack.c.b16 %v397, %v395
      %v432 = vpack.c.b16 %v398, %v396
      %v433 = vpack.c.b16 %v401, %v399
      %v434 = vpack.c.b16 %v402, %v400
      %467 = vmatprep.subr.bf16.mxu0 %v404
      %468 = vmatpush1.bf16.msra.mxu0 %v403
      %469 = vmatprep.subr.bf16.mxu0 %v406
      %470 = vmatpush1.bf16.msra.mxu0 %v405
      %471 = vmatprep.subr.bf16.mxu0 %v408
      %472 = vmatpush1.bf16.msra.mxu0 %v407
      %473 = vmatprep.subr.bf16.mxu0 %v410
      %474 = vmatpush1.bf16.msra.mxu0 %v409
      %475 = vmatprep.subr.bf16.mxu0 %v412
      %476 = vmatpush1.bf16.msra.mxu0 %v411
      %477 = vmatprep.subr.bf16.mxu0 %v414
      %478 = vmatpush1.bf16.msra.mxu0 %v413
      %479 = vmatprep.subr.bf16.mxu0 %v416
      %480 = vmatpush1.bf16.msra.mxu0 %v415
      %481 = vmatprep.subr.bf16.mxu0 %v418
      %482 = vmatpush1.bf16.msra.mxu0 %v417
      %483 = vmatprep.subr.bf16.mxu0 %v420
      %484 = vmatpush1.bf16.msra.mxu0 %v419
      %485 = vmatprep.subr.bf16.mxu0 %v422
      %486 = vmatpush1.bf16.msra.mxu0 %v421
      %487 = vmatprep.subr.bf16.mxu0 %v424
      %488 = vmatpush1.bf16.msra.mxu0 %v423
      %489 = vmatprep.subr.bf16.mxu0 %v426
      %490 = vmatpush1.bf16.msra.mxu0 %v425
      %491 = vmatprep.subr.bf16.mxu0 %v428
      %492 = vmatpush1.bf16.msra.mxu0 %v427
      %493 = vmatprep.subr.bf16.mxu0 %v430
      %494 = vmatpush1.bf16.msra.mxu0 %v429
      %495 = vmatprep.subr.bf16.mxu0 %v432
      %496 = vmatpush1.bf16.msra.mxu0 %v431
      %497 = vmatprep.subr.bf16.mxu0 %v434
      %498 = vmatpush1.bf16.msra.mxu0 %v433
      %499 = vmatprep.mubr.bf16.mxu0 %v262
      %500 = vmatmul.mubr.bf16.gmra.mrb[0].mxu0 %v261
      %v501 = vpop.f32.mrb[0].mxu0
      %v502 = vadd.f32 %v300, %v501
      %v503 = vpop.f32.mrb[0].mxu0
      %v504 = vadd.f32 %v304, %v503
      %v505 = vpop.f32.mrb[0].mxu0
      %v506 = vadd.f32 %v300, %v505
      %v507 = vpop.f32.mrb[0].mxu0
      %v508 = vadd.f32 %v304, %v507
      %509 = vdwg.mxu0
      %510 = vst [vmem:[#allocation9] sm:$0xff] %v502
      %511 = vst [vmem:[#allocation9 + $0x8] sm:$0xff] %v504
      %512 = vst [vmem:[#allocation9 + $0x10] sm:$0xff] %v506
      %513 = vst [vmem:[#allocation9 + $0x18] sm:$0xff] %v508
    $region45: #{tpu_custom_call.1} parent=1 // pred_fallthru
      _
    // Predicated region
    $region46: #{tpu_custom_call.1} parent=1 // pred_check
      _
    $region47: #{tpu_custom_call.1} parent=1 // pred_check_branch
      %515 = sbr.rel (0) target = $region49
    $region48: #{tpu_custom_call.1} parent=1 // pred_region
      %s517 = ssub.s32 512, 512
      %518 = vsyncadd [#allocation5], %s517
      %s519 = sshll.u32 [#allocation9], 4
      %s520 = int_to_ptr.vmem [resolvable:$true] %s519
      %525 = dma.vmem_to_hbm [thread:$0]  %s520, 512, %s5, [#allocation5], 256, 256, 16
    $region49: #{tpu_custom_call.1} parent=1 // pred_fallthru
      _
    // Predicated region
    $region50: #{tpu_custom_call.1} parent=1 // pred_check
      _
    $region51: #{tpu_custom_call.1} parent=1 // pred_check_branch
      %527 = sbr.rel (0) target = $region53
    $region52: #{tpu_custom_call.1} parent=1 // pred_region
      %528 = dma.done [#allocation5], 512
    $region53: #{tpu_custom_call.1} parent=1 // pred_fallthru
      _
    %529 = vsyncpa [#allocation4], 1
    %530 = vsyncpa [#allocation7], 1
    %531 = vsyncpa [#allocation5], 1

</llo_original>
